<compile_context>
chip_gen: v7x
topology: tpu7x:2x2x1
jax: 0.10.0
libtpu: 0.0.40
codegen_flags: <defaults>
</compile_context>

<pallas_src>
import jax
import jax.numpy as jnp
from jax import lax
from jax.experimental import pallas as pl
from jax.experimental.pallas import tpu as pltpu


def _mlp_nlc_kernel(x_ref, w_ref, b_ref, o_ref):
    # x_ref: (1, C_in, TN)  input tile, NCL layout
    # w_ref: (C_in, C_out)  conv weight, (in, out)
    # b_ref: (1, C_out)     conv bias
    # o_ref: (1, TN, C_out) output tile, NLC layout
    # Contract over dim 0 of the (C_in, TN) tile: Mosaic folds the transpose
    # into the MXU operand feed (no materialized XLU transpose, no upcast).
    y = lax.dot_general(
        x_ref[0], w_ref[...],
        dimension_numbers=(((0,), (0,)), ((), ())),
        preferred_element_type=jnp.float32)            # (TN, C_out), f32 acc
    y = y + b_ref[...].astype(jnp.float32)
    o_ref[0] = y.astype(o_ref.dtype)


def _mlp_ncl_kernel(x_ref, w_ref, b_ref, o_ref):
    # x_ref: (1, C_in, TN)  input tile, NCL layout
    # w_ref: (C_out, C_in)  conv weight, (out, in)
    # b_ref: (C_out, 1)     conv bias
    # o_ref: (1, C_out, TN) output tile, NCL layout (TN on lanes -> dense vst)
    y = jnp.dot(w_ref[...], x_ref[0],
                preferred_element_type=jnp.float32)     # (C_out, TN), f32 acc
    y = y + b_ref[...].astype(jnp.float32)
    o_ref[0] = y.astype(o_ref.dtype)


def _choose_tile_n(N, B, c_in, c_out, itemsize, tile_n):
    """Pick the N-tile: as large as the VMEM budget allows, lane-aligned,
    preferring divisors of N, and small enough to give >= 8 grid steps."""
    if N <= 128:
        return N  # full-extent block; (8,128) rule satisfied by full dims.

    # Conservative VMEM budget for the double-buffered in/out blocks (leaves
    # plenty of headroom under v5e's 16 MiB scoped default and v7x's VMEM).
    budget = 8 * 1024 * 1024
    lanes_out = ((c_out + 127) // 128) * 128            # out block lane padding
    subl_in = ((c_in + 7) // 8) * 8                     # in block sublane padding
    per_n = 2 * itemsize * (subl_in + lanes_out)        # bytes/point, 2 buffers
    cap = max(128, (budget // per_n) // 128 * 128)

    tn = min(tile_n, N, cap)
    tn = max(128, (tn // 128) * 128)
    # Prefer a tile that divides N (no ragged last tile).
    while tn > 128 and N % tn != 0:
        tn -= 128
    # Keep enough grid steps for megacore sharding (v7x) + pipeline overlap.
    while tn > 128 and B * pl.cdiv(N, tn) < 8:
        half = ((tn // 2) // 128) * 128
        if half < 128 or N % half != 0:
            break
        tn = half
    return tn


def post_share_mlp(x, weight, bias, permute=True, tile_n=2048):
    """Pallas implementation of Post_ShareMLP.forward.

    x:      (B, in_dim, N)
    weight: (out_dim, in_dim, 1)  Conv1d weight
    bias:   (out_dim,)            Conv1d bias
    Returns (B, N, out_dim) if permute else (B, out_dim, N).
    """
    B, c_in, N = x.shape
    c_out = weight.shape[0]
    w2d = weight[:, :, 0].astype(x.dtype)               # (C_out, C_in)

    tn = _choose_tile_n(N, B, c_in, c_out, jnp.dtype(x.dtype).itemsize, tile_n)
    grid = (B, pl.cdiv(N, tn))

    x_spec = pl.BlockSpec((1, c_in, tn), lambda bi, ni: (bi, 0, ni))
    cparams = pltpu.CompilerParams(
        dimension_semantics=("parallel", "parallel"))

    if permute:
        # Conv1d(x).permute(0,2,1): produce NLC directly (no extra HBM pass).
        w_t = jnp.transpose(w2d, (1, 0))                # (C_in, C_out), tiny
        b = bias.reshape(1, c_out)
        return pl.pallas_call(
            _mlp_nlc_kernel,
            out_shape=jax.ShapeDtypeStruct((B, N, c_out), x.dtype),
            grid=grid,
            in_specs=[
                x_spec,
                pl.BlockSpec((c_in, c_out), lambda bi, ni: (0, 0)),
                pl.BlockSpec((1, c_out), lambda bi, ni: (0, 0)),
            ],
            out_specs=pl.BlockSpec((1, tn, c_out), lambda bi, ni: (bi, ni, 0)),
            compiler_params=cparams,
        )(x, w_t, b)

    # permute=False: NCL-native kernel -- no x transpose, lane-dense output,
    # and no XLA transpose over the result in HBM.
    b = bias.reshape(c_out, 1)
    return pl.pallas_call(
        _mlp_ncl_kernel,
        out_shape=jax.ShapeDtypeStruct((B, c_out, N), x.dtype),
        grid=grid,
        in_specs=[
            x_spec,
            pl.BlockSpec((c_out, c_in), lambda bi, ni: (0, 0)),
            pl.BlockSpec((c_out, 1), lambda bi, ni: (0, 0)),
        ],
        out_specs=pl.BlockSpec((1, c_out, tn), lambda bi, ni: (bi, 0, ni)),
        compiler_params=cparams,
    )(x, w2d, b)


if __name__ == "__main__":
    key = jax.random.PRNGKey(0)
    B, in_dim, out_dim, N = 2, 32, 64, 256

    kx, kw, kb = jax.random.split(key, 3)
    x = jax.random.normal(kx, (B, in_dim, N), jnp.float32)
    weight = 0.1 * jax.random.normal(kw, (out_dim, in_dim, 1), jnp.float32)
    bias = 0.1 * jax.random.normal(kb, (out_dim,), jnp.float32)

    fwd_nlc = jax.jit(lambda x_, w_, b_: post_share_mlp(x_, w_, b_, permute=True))
    fwd_ncl = jax.jit(lambda x_, w_, b_: post_share_mlp(x_, w_, b_, permute=False))

    out_nlc = jax.block_until_ready(fwd_nlc(x, weight, bias))
    out_ncl = jax.block_until_ready(fwd_ncl(x, weight, bias))

    # References: Conv1d(in,out,1)(x) [+ permute]
    ref_ncl = jnp.einsum('bin,oi->bon', x, weight[:, :, 0]) + bias[None, :, None]
    ref_nlc = jnp.transpose(ref_ncl, (0, 2, 1))

    assert out_nlc.shape == (B, N, out_dim)
    assert out_ncl.shape == (B, out_dim, N)
    assert bool(jnp.all(jnp.isfinite(out_nlc)))
    assert bool(jnp.all(jnp.isfinite(out_ncl)))
    assert bool(jnp.allclose(out_nlc, ref_nlc, atol=2e-4, rtol=2e-4))
    assert bool(jnp.allclose(out_ncl, ref_ncl, atol=2e-4, rtol=2e-4))

    print("KERNEL_OK")
</pallas_src>

<mosaic_0001>
module attributes {stable_mosaic.version = 11 : i64} {
  func.func @_mlp_nlc_kernel(%arg0: i32, %arg1: i32, %arg2: memref<1x32x128xf32, #tpu.memory_space<vmem>>, %arg3: memref<32x64xf32, #tpu.memory_space<vmem>>, %arg4: memref<1x64xf32, #tpu.memory_space<vmem>>, %arg5: memref<1x128x64xf32, #tpu.memory_space<vmem>>) attributes {dimension_semantics = [#tpu.dimension_semantics<parallel>, #tpu.dimension_semantics<parallel>], iteration_bounds = array<i64: 2, 2>, scalar_prefetch = 0 : i64, scratch_operands = 0 : i64, tpu.core_type = #tpu.core_type<tc>, window_params = [{transform_indices = @transform_0, window_bounds = array<i64: 1, 32, 128>}, {pipeline_mode = #tpu.pipeline_mode<synchronous>, transform_indices = @transform_1, window_bounds = array<i64: 32, 64>}, {pipeline_mode = #tpu.pipeline_mode<synchronous>, transform_indices = @transform_2, window_bounds = array<i64: 1, 64>}, {transform_indices = @transform_3, window_bounds = array<i64: 1, 128, 64>}]} {
    %c0 = arith.constant 0 : index
    %c0_0 = arith.constant 0 : index
    %c0_1 = arith.constant 0 : index
    %0 = vector.load %arg2[%c0, %c0_0, %c0_1] : memref<1x32x128xf32, #tpu.memory_space<vmem>>, vector<1x32x128xf32>
    %1 = vector.shape_cast %0 : vector<1x32x128xf32> to vector<32x128xf32>
    %c0_2 = arith.constant 0 : index
    %c0_3 = arith.constant 0 : index
    %2 = vector.load %arg3[%c0_2, %c0_3] : memref<32x64xf32, #tpu.memory_space<vmem>>, vector<32x64xf32>
    %cst = arith.constant dense<0.000000e+00> : vector<128x64xf32>
    %3 = tpu.matmul %1, %2, %cst {dimension_numbers = #tpu.dot_dimension_numbers<[0], [0], [1], [1], [0, 1, 1, 1], [], []>} : vector<32x128xf32>, vector<32x64xf32>, vector<128x64xf32> -> vector<128x64xf32>
    %c0_4 = arith.constant 0 : index
    %c0_5 = arith.constant 0 : index
    %4 = vector.load %arg4[%c0_4, %c0_5] : memref<1x64xf32, #tpu.memory_space<vmem>>, vector<1x64xf32>
    %5 = vector.broadcast %4 : vector<1x64xf32> to vector<128x64xf32>
    %6 = arith.addf %3, %5 : vector<128x64xf32>
    %c0_6 = arith.constant 0 : index
    %c0_7 = arith.constant 0 : index
    %c0_8 = arith.constant 0 : index
    %7 = vector.load %arg5[%c0_6, %c0_7, %c0_8] : memref<1x128x64xf32, #tpu.memory_space<vmem>>, vector<1x128x64xf32>
    %8 = vector.shape_cast %7 : vector<1x128x64xf32> to vector<128x64xf32>
    %9 = vector.shape_cast %6 : vector<128x64xf32> to vector<1x128x64xf32>
    tpu.vector_store %arg5[%c0_6, %c0_7, %c0_8], %9 {strides = array<i32>} : memref<1x128x64xf32, #tpu.memory_space<vmem>>, vector<1x128x64xf32>,
    return
  }
  func.func @transform_0(%arg0: i32, %arg1: i32) -> (i32, i32, i32) {
    %c0_i32 = arith.constant 0 : i32
    %c0_i32_0 = arith.constant 0 : i32
    return %arg0, %c0_i32, %arg1 : i32, i32, i32
  }
  func.func @transform_1(%arg0: i32, %arg1: i32) -> (i32, i32) {
    %c0_i32 = arith.constant 0 : i32
    %c0_i32_0 = arith.constant 0 : i32
    %c0_i32_1 = arith.constant 0 : i32
    return %c0_i32, %c0_i32_0 : i32, i32
  }
  func.func @transform_2(%arg0: i32, %arg1: i32) -> (i32, i32) {
    %c0_i32 = arith.constant 0 : i32
    %c0_i32_0 = arith.constant 0 : i32
    %c0_i32_1 = arith.constant 0 : i32
    return %c0_i32, %c0_i32_0 : i32, i32
  }
  func.func @transform_3(%arg0: i32, %arg1: i32) -> (i32, i32, i32) {
    %c0_i32 = arith.constant 0 : i32
    %c0_i32_0 = arith.constant 0 : i32
    return %arg0, %arg1, %c0_i32 : i32, i32, i32
  }
}

</mosaic_0001>

<llo_original>
// kernel: _lambda_.1
$region0: #{_lambda_.1}
  #allocation0 [shape = 'u32[]', space=smem, size = 0x4, offset = 0x4, fixed_abs, tag = 'smem constant byte address 0x4 - core index']
  #allocation1 [shape = 'u32[144,128]{1,0:T(1,128)}', space=vmem, size = 0x12000, scoped, tag = 'internal scratch']
  %s0 = inlined_call_operand.hbm [shape: f32[2,32,256], index: 0, kind: input, shape index: {}]
  %s1 = inlined_call_operand.hbm [shape: f32[32,64], index: 1, kind: input, shape index: {}]
  %s2 = inlined_call_operand.vmem [shape: f32[1,64], index: 2, kind: input, shape index: {}]
  %s3 = inlined_call_operand.vmem [shape: f32[2,256,64], index: 3, kind: output, shape index: {}]
  %s4 = sld [smem:[#allocation0]]
  $region53: #{_lambda_.1} parent=0
    _
  %s6 = ssub.s32 1, %s4
  %s7 = scalar_select 0, %s6, %s4
  $region1: #{_lambda_.1} parent=0
    #allocation2 [shape = 'u8[32768]{0}', space=vmem, size = 0x8000, scoped, tag = 'input window, operand 0']
    #allocation3 [shape = 's32[2]{0}', space=sflag, size = 0x8, scoped, tag = 'scoped memory for _lambda_.1']
    #allocation4 [shape = 'u8[16384]{0}', space=vmem, size = 0x4000, scoped, tag = 'input window, operand 1, single buffered']
    #allocation5 [shape = 's32[1]{0}', space=sflag, size = 0x4, scoped, tag = 'scoped memory for _lambda_.1']
    %8 = vsyncpa [#allocation3], 0
    %s9 = scalar_lea.sflag [#allocation3], 1
    %10 = vsyncpa %s9, 0
    %11 = vsyncpa [#allocation5], 0
    loop: start=0, step=1, limit=6
    $region2: #{_lambda_.1} parent=1 // loop_pre_header
      _
    $region3: #{_lambda_.1} parent=1 // loop_header
      %s13 = sphi 0, %s17
      %p14 = scmp.ge.s32.totalorder %s13, 6
      %s20 = sphi 0, %s32
      %s21 = sphi 0, %s28
      %s22 = sphi 0, %s20
      %s23 = sphi 0, %s21
      %s24 = sphi 0, %s22
      %s25 = sphi 0, %s23
      %s37 = sphi 0, %s39
      %s40 = sphi 0, %s37
      %s41 = sphi 0, %s40
      %s57 = sphi 0, %s41
      %s61 = sphi 0, %s61
      %s63 = sphi 0, %s61
      %s64 = sphi 0, %s63
      %s78 = sphi 0, %s64
      %s82 = sphi 0, %s82
      %s84 = sphi 0, %s82
      %s85 = sphi 0, %s84
      %s99 = sphi 0, %s85
      %s107 = sphi 0, %s109
      %s110 = sphi 0, %s107
      %s111 = sphi 0, %s110
      %s127 = sphi 0, %s111
    $region4: #{_lambda_.1} parent=1 // loop_header_branch
      %16 = sbr.rel (%p14) target = $region8
    $region5: #{_lambda_.1} parent=1 // loop_body
      %s18 = ssub.s32 %s13, 1
      %s19 = ssub.s32 %s13, 2
      %s26 = sadd.s32 1, %s21
      %p27 = scmp.ge.s32.totalorder %s26, 2
      %s28 = scalar_select %p27, 0, %s26
      %s29 = sadd.s32 1, %s20
      %s30 = scalar_select %p27, %s29, %s20
      %p31 = scmp.ge.s32.totalorder %s30, 2
      %s32 = scalar_select %p31, 0, %s30
      %s33 = ssub.s32 %s20, %s32
      %s34 = ssub.s32 %s21, %s28
      %s35 = sor.u32 %s33, %s34
      %p36 = scmp.eq.s32.totalorder %s35, 0
      %s38 = sadd.s32 %s37, 1
      %s39 = scalar_select %p36, %s37, %s38
      %p42 = pneg %p36
      %p43 = scmp.eq.s32.totalorder %s13, 3
      %p44 = por %p42, %p43
      %p45 = scmp.ne.s32.totalorder %s37, %s40
      %p46 = scmp.eq.s32.totalorder %s13, 0
      %p47 = por %p45, %p46
      %p48 = scmp.ne.s32.totalorder %s37, %s40
      %p49 = scmp.eq.s32.totalorder %s18, 3
      %p50 = por %p48, %p49
      %p51 = scmp.ne.s32.totalorder %s40, %s41
      %p52 = scmp.eq.s32.totalorder %s18, 0
      %p53 = por %p51, %p52
      %p54 = scmp.ne.s32.totalorder %s40, %s41
      %p55 = scmp.eq.s32.totalorder %s19, 3
      %p56 = por %p54, %p55
      %p58 = scmp.ne.s32.totalorder %s41, %s57
      %p59 = scmp.eq.s32.totalorder %s19, 0
      %p60 = por %p58, %p59
      %s62 = sadd.s32 %s61, 1
      %p65 = scmp.eq.s32.totalorder %s13, 3
      %p66 = scmp.ne.s32.totalorder %s61, %s63
      %p67 = scmp.eq.s32.totalorder %s13, 0
      %p68 = por %p66, %p67
      %p69 = scmp.ne.s32.totalorder %s61, %s63
      %p70 = scmp.eq.s32.totalorder %s18, 3
      %p71 = por %p69, %p70
      %p72 = scmp.ne.s32.totalorder %s63, %s64
      %p73 = scmp.eq.s32.totalorder %s18, 0
      %p74 = por %p72, %p73
      %p75 = scmp.ne.s32.totalorder %s63, %s64
      %p76 = scmp.eq.s32.totalorder %s19, 3
      %p77 = por %p75, %p76
      %p79 = scmp.ne.s32.totalorder %s64, %s78
      %p80 = scmp.eq.s32.totalorder %s19, 0
      %p81 = por %p79, %p80
      %s83 = sadd.s32 %s82, 1
      %p86 = scmp.eq.s32.totalorder %s13, 3
      %p87 = scmp.ne.s32.totalorder %s82, %s84
      %p88 = scmp.eq.s32.totalorder %s13, 0
      %p89 = por %p87, %p88
      %p90 = scmp.ne.s32.totalorder %s82, %s84
      %p91 = scmp.eq.s32.totalorder %s18, 3
      %p92 = por %p90, %p91
      %p93 = scmp.ne.s32.totalorder %s84, %s85
      %p94 = scmp.eq.s32.totalorder %s18, 0
      %p95 = por %p93, %p94
      %p96 = scmp.ne.s32.totalorder %s84, %s85
      %p97 = scmp.eq.s32.totalorder %s19, 3
      %p98 = por %p96, %p97
      %p100 = scmp.ne.s32.totalorder %s85, %s99
      %p101 = scmp.eq.s32.totalorder %s19, 0
      %p102 = por %p100, %p101
      %s103 = ssub.s32 %s20, %s32
      %s104 = ssub.s32 %s21, %s28
      %s105 = sor.u32 %s103, %s104
      %p106 = scmp.eq.s32.totalorder %s105, 0
      %s108 = sadd.s32 %s107, 1
      %s109 = scalar_select %p106, %s107, %s108
      %p112 = pneg %p106
      %p113 = scmp.eq.s32.totalorder %s13, 3
      %p114 = por %p112, %p113
      %p115 = scmp.ne.s32.totalorder %s107, %s110
      %p116 = scmp.eq.s32.totalorder %s13, 0
      %p117 = por %p115, %p116
      %p118 = scmp.ne.s32.totalorder %s107, %s110
      %p119 = scmp.eq.s32.totalorder %s18, 3
      %p120 = por %p118, %p119
      %p121 = scmp.ne.s32.totalorder %s110, %s111
      %p122 = scmp.eq.s32.totalorder %s18, 0
      %p123 = por %p121, %p122
      %p124 = scmp.ne.s32.totalorder %s110, %s111
      %p125 = scmp.eq.s32.totalorder %s19, 3
      %p126 = por %p124, %p125
      %p128 = scmp.ne.s32.totalorder %s111, %s127
      %p129 = scmp.eq.s32.totalorder %s19, 0
      %p130 = por %p128, %p129
      %p131 = scmp.le.s32.totalorder 1, %s13
      %p132 = scmp.lt.s32.totalorder %s13, 5
      %p133 = pnand %p131, %p132
      %p134 = pneg %p133
      // Predicated region
      $region9: #{_lambda_.1} parent=5 // pred_check
        _
      $region10: #{_lambda_.1} parent=5 // pred_check_branch
        %136 = sbr.rel (%p133) target = $region12
      $region11: #{_lambda_.1} parent=5 // pred_region
        %s137 = ssub.s32 %s13, 1
        // Predicated region
        $region13: #{_lambda_.1} parent=11 // pred_check
          %p138 = pneg %p74
        $region14: #{_lambda_.1} parent=11 // pred_check_branch
          %140 = sbr.rel (%p138) target = $region16
        $region15: #{_lambda_.1} parent=11 // pred_region
          %s142 = ssub.s32 512, 512
          %143 = vsyncadd [#allocation5], %s142
          %s144 = sshll.u32 [#allocation4], 4
          %s145 = int_to_ptr.vmem [resolvable:$true] %s144
          %150 = dma.hbm_to_vmem [thread:$0]  %s1, 512, %s145, [#allocation5], 128, 128, 8
        $region16: #{_lambda_.1} parent=11 // pred_fallthru
          _
        // Predicated region
        $region17: #{_lambda_.1} parent=11 // pred_check
          %p151 = pneg %p95
        $region18: #{_lambda_.1} parent=11 // pred_check_branch
          %153 = sbr.rel (%p151) target = $region20
        $region19: #{_lambda_.1} parent=11 // pred_region
          _
        $region20: #{_lambda_.1} parent=11 // pred_fallthru
          _
      $region12: #{_lambda_.1} parent=5 // pred_fallthru
        _
      %p154 = scmp.lt.s32.totalorder %s13, 4
      // Predicated region
      $region21: #{_lambda_.1} parent=5 // pred_check
        %p155 = pneg %p154
      $region22: #{_lambda_.1} parent=5 // pred_check_branch
        %157 = sbr.rel (%p155) target = $region24
      $region23: #{_lambda_.1} parent=5 // pred_region
        // Predicated region
        $region25: #{_lambda_.1} parent=23 // pred_check
          %p158 = pneg %p47
        $region26: #{_lambda_.1} parent=23 // pred_check_branch
          %160 = sbr.rel (%p158) target = $region28
        $region27: #{_lambda_.1} parent=23 // pred_region
          %s161 = sand.u32 %s37, 1
          %s162 = scalar_lea.sflag [#allocation3], %s161
          %s163 = sand.u32 %s37, 1
          %s164 = smul.addr %s163, 32
          %s165 = scalar_lea.vmem [#allocation2], %s164
          %s167 = ssub.s32 512, 512
          %168 = vsyncadd %s162, %s167
          %s169 = smul.addr %s20, 8
          %s170 = sadd.s32 %s21, %s169
          %s171 = smul.addr %s170, 128
          %s172 = scalar_lea.hbm %s0, %s171
          %s173 = sshll.u32 %s165, 4
          %s174 = int_to_ptr.vmem [resolvable:$true] %s173
          %179 = dma.hbm_to_vmem [thread:$0]  %s172, 512, %s174, %s162, 256, 128, 8
        $region28: #{_lambda_.1} parent=23 // pred_fallthru
          _
      $region24: #{_lambda_.1} parent=5 // pred_fallthru
        _
      %p180 = scmp.le.s32.totalorder 1, %s13
      %p181 = scmp.lt.s32.totalorder %s13, 5
      %p182 = pnand %p180, %p181
      %p183 = pneg %p182
      // Predicated region
      $region29: #{_lambda_.1} parent=5 // pred_check
        _
      $region30: #{_lambda_.1} parent=5 // pred_check_branch
        %185 = sbr.rel (%p182) target = $region32
      $region31: #{_lambda_.1} parent=5 // pred_region
        %s186 = ssub.s32 %s13, 1
        %s187 = sand.u32 %s40, 1
        %s188 = scalar_lea.sflag [#allocation3], %s187
        %s189 = sand.u32 %s40, 1
        %s190 = smul.addr %s189, 32
        %s191 = scalar_lea.vmem [#allocation2], %s190
        // Predicated region
        $region33: #{_lambda_.1} parent=31 // pred_check
          %p192 = pneg %p53
        $region34: #{_lambda_.1} parent=31 // pred_check_branch
          %194 = sbr.rel (%p192) target = $region36
        $region35: #{_lambda_.1} parent=31 // pred_region
          %195 = dma.done %s188, 512
        $region36: #{_lambda_.1} parent=31 // pred_fallthru
          _
        // Predicated region
        $region37: #{_lambda_.1} parent=31 // pred_check
          %p196 = pneg %p74
        $region38: #{_lambda_.1} parent=31 // pred_check_branch
          %198 = sbr.rel (%p196) target = $region40
        $region39: #{_lambda_.1} parent=31 // pred_region
          %199 = dma.done [#allocation5], 512
        $region40: #{_lambda_.1} parent=31 // pred_fallthru
          _
        %s200 = sand.u32 %s40, 1
        %s201 = scalar_lea.sflag [#allocation3], %s200
        %s202 = sand.u32 %s40, 1
        %s203 = smul.addr %s202, 32
        %s204 = scalar_lea.vmem [#allocation2], %s203
        %p205 = pneg %p53
        %p206 = pneg %p50
        %p207 = pneg %p74
        %p208 = pneg %p71
        %p209 = pneg %p95
        %p210 = pneg %p92
        %p211 = pneg %p123
        %p212 = pneg %p120
        %s213 = smul.u32 16, %s23
        %p214 = scmp.lt.s32.totalorder %s22, 1
        %s215 = scalar_select %p214, %s22, 1
        %p216 = scmp.lt.s32.totalorder %s213, 31
        %s217 = scalar_select %p216, %s213, 31
        %s218 = smul.addr %s215, 32
        %s219 = sadd.s32 %s217, %s218
        %s220 = smul.addr %s219, 8
        %s221 = scalar_lea.vmem %s3, %s220
        %s222 = smul.u32 16, %s23
        %p223 = scmp.lt.s32.totalorder %s22, 1
        %s224 = scalar_select %p223, %s22, 1
        %p225 = scmp.lt.s32.totalorder %s222, 31
        %s226 = scalar_select %p225, %s222, 31
        %s227 = smul.addr %s224, 32
        %s228 = sadd.s32 %s226, %s227
        %s229 = smul.addr %s228, 8
        %s230 = scalar_lea.vmem %s3, %s229
        %s231 = smul.u32 16, %s23
        %v232 = vld [vmem:[%s191] sm:$0xff]
        %v233 = vld [vmem:[%s191 + $0x8] sm:$0xff]
        %v234 = vld [vmem:[%s191 + $0x10] sm:$0xff]
        %v235 = vld [vmem:[%s191 + $0x18] sm:$0xff]
        %v236 = vld [vmem:[#allocation4] sm:$0xff]
        %v237 = vld [vmem:[#allocation4 + $0x8] sm:$0xff]
        %v238 = vld [vmem:[#allocation4 + $0x10] sm:$0xff]
        %v239 = vld [vmem:[#allocation4 + $0x18] sm:$0xff]
        %v240 = vld [vmem:[%s2] sm:$0x1]
        %v242 = vlaneseq
        %v243 = vshrl.u32 %v242, 7
        %v244 = vsub.s32 0, %v243
        %v245 = vrot.slane %v240, %v244
        %247 = vxpose.xlu0.b32.start [1/16] %v232, 128
        %248 = vxpose.xlu0.b32.cont [2/16] %v233, 128
        %249 = vxpose.xlu0.b32.cont [3/16] %v234, 128
        %250 = vxpose.xlu0.b32.cont [4/16] %v235, 128
        %251 = vxpose.xlu0.b32.cont [5/16] 0.0, 128
        %252 = vxpose.xlu0.b32.cont [6/16] 0.0, 128
        %253 = vxpose.xlu0.b32.cont [7/16] 0.0, 128
        %254 = vxpose.xlu0.b32.cont [8/16] 0.0, 128
        %255 = vxpose.xlu0.b32.cont [9/16] 0.0, 128
        %256 = vxpose.xlu0.b32.cont [10/16] 0.0, 128
        %257 = vxpose.xlu0.b32.cont [11/16] 0.0, 128
        %258 = vxpose.xlu0.b32.cont [12/16] 0.0, 128
        %259 = vxpose.xlu0.b32.cont [13/16] 0.0, 128
        %260 = vxpose.xlu0.b32.cont [14/16] 0.0, 128
        %261 = vxpose.xlu0.b32.cont [15/16] 0.0, 128
        %262 = vxpose.xlu0.b32.end [16/16] 0.0, 128
        %v263 = vpop.trf.xlu0
        %v264 = vpop.trf.xlu0
        %v265 = vpop.trf.xlu0
        %v266 = vpop.trf.xlu0
        %v267 = vpop.trf.xlu0
        %v268 = vpop.trf.xlu0
        %v269 = vpop.trf.xlu0
        %v270 = vpop.trf.xlu0
        %v271 = vpop.trf.xlu0
        %v272 = vpop.trf.xlu0
        %v273 = vpop.trf.xlu0
        %v274 = vpop.trf.xlu0
        %v275 = vpop.trf.xlu0
        %v276 = vpop.trf.xlu0
        %v277 = vpop.trf.xlu0
        %v278 = vpop.trf.xlu0
        %vm279 = vcmask 261120
        %v281 = vsel %vm279, %v263, 0
        %v284 = vsel %vm279, %v264, 0
        %v287 = vsel %vm279, %v265, 0
        %v290 = vsel %vm279, %v266, 0
        %v293 = vsel %vm279, %v267, 0
        %v296 = vsel %vm279, %v268, 0
        %v299 = vsel %vm279, %v269, 0
        %v302 = vsel %vm279, %v270, 0
        %v305 = vsel %vm279, %v271, 0
        %v308 = vsel %vm279, %v272, 0
        %v311 = vsel %vm279, %v273, 0
        %v314 = vsel %vm279, %v274, 0
        %v317 = vsel %vm279, %v275, 0
        %v320 = vsel %vm279, %v276, 0
        %v323 = vsel %vm279, %v277, 0
        %v326 = vsel %vm279, %v278, 0
        %328 = vmatprep.subr.mxu0 0.0
        %329 = vmatpush1.msra.mxu0 %v236
        %330 = vmatprep.subr.mxu0 0.0
        %331 = vmatpush1.msra.mxu0 %v237
        %332 = vmatprep.subr.mxu0 0.0
        %333 = vmatpush1.msra.mxu0 %v238
        %334 = vmatprep.subr.mxu0 0.0
        %335 = vmatpush1.msra.mxu0 %v239
        %336 = vmatprep.subr.mxu0 0.0
        %337 = vmatpush1.msra.mxu0 0.0
        %338 = vmatprep.subr.mxu0 0.0
        %339 = vmatpush1.msra.mxu0 0.0
        %340 = vmatprep.subr.mxu0 0.0
        %341 = vmatpush1.msra.mxu0 0.0
        %342 = vmatprep.subr.mxu0 0.0
        %343 = vmatpush1.msra.mxu0 0.0
        %344 = vmatprep.subr.mxu0 0.0
        %345 = vmatpush1.msra.mxu0 0.0
        %346 = vmatprep.subr.mxu0 0.0
        %347 = vmatpush1.msra.mxu0 0.0
        %348 = vmatprep.subr.mxu0 0.0
        %349 = vmatpush1.msra.mxu0 0.0
        %350 = vmatprep.subr.mxu0 0.0
        %351 = vmatpush1.msra.mxu0 0.0
        %352 = vmatprep.subr.mxu0 0.0
        %353 = vmatpush1.msra.mxu0 0.0
        %354 = vmatprep.subr.mxu0 0.0
        %355 = vmatpush1.msra.mxu0 0.0
        %356 = vmatprep.subr.mxu0 0.0
        %357 = vmatpush1.msra.mxu0 0.0
        %358 = vmatprep.subr.mxu0 0.0
        %359 = vmatpush1.msra.mxu0 0.0
        %360 = vmatprep.subr.mxu0 0.0
        %361 = vmatpush1.msra.mxu0 0.0
        %362 = vmatprep.subr.mxu0 0.0
        %363 = vmatpush1.msra.mxu0 0.0
        %364 = vmatprep.subr.mxu0 0.0
        %365 = vmatpush1.msra.mxu0 0.0
        %366 = vmatprep.subr.mxu0 0.0
        %367 = vmatpush1.msra.mxu0 0.0
        %368 = vmatprep.subr.mxu0 0.0
        %369 = vmatpush1.msra.mxu0 0.0
        %370 = vmatprep.subr.mxu0 0.0
        %371 = vmatpush1.msra.mxu0 0.0
        %372 = vmatprep.subr.mxu0 0.0
        %373 = vmatpush1.msra.mxu0 0.0
        %374 = vmatprep.subr.mxu0 0.0
        %375 = vmatpush1.msra.mxu0 0.0
        %376 = vmatprep.subr.mxu0 0.0
        %377 = vmatpush1.msra.mxu0 0.0
        %378 = vmatprep.subr.mxu0 0.0
        %379 = vmatpush1.msra.mxu0 0.0
        %380 = vmatprep.subr.mxu0 0.0
        %381 = vmatpush1.msra.mxu0 0.0
        %382 = vmatprep.subr.mxu0 0.0
        %383 = vmatpush1.msra.mxu0 0.0
        %384 = vmatprep.subr.mxu0 0.0
        %385 = vmatpush1.msra.mxu0 0.0
        %386 = vmatprep.subr.mxu0 0.0
        %387 = vmatpush1.msra.mxu0 0.0
        %388 = vmatprep.subr.mxu0 0.0
        %389 = vmatpush1.msra.mxu0 0.0
        %390 = vmatprep.subr.mxu0 0.0
        %391 = vmatpush1.msra.mxu0 0.0
        %392 = vmatprep.mubr.f32.mxu0 0.0
        %393 = vmatmul.mubr.f32.gmra.mrb[0].mxu0 %v281
        %v394 = vpop.f32.mrb[0].mxu0
        %v395 = vadd.f32 %v245, %v394
        %v396 = vpop.f32.mrb[0].mxu0
        %397 = vmatprep.mubr.f32.mxu0 0.0
        %398 = vmatmul.mubr.f32.gmra.mrb[0].mxu0 %v284
        %v399 = vpop.f32.mrb[0].mxu0
        %v400 = vadd.f32 %v245, %v399
        %v401 = vpop.f32.mrb[0].mxu0
        %402 = vmatprep.mubr.f32.mxu0 0.0
        %403 = vmatmul.mubr.f32.gmra.mrb[0].mxu0 %v287
        %v404 = vpop.f32.mrb[0].mxu0
        %v405 = vadd.f32 %v245, %v404
        %v406 = vpop.f32.mrb[0].mxu0
        %407 = vmatprep.mubr.f32.mxu0 0.0
        %408 = vmatmul.mubr.f32.gmra.mrb[0].mxu0 %v290
        %v409 = vpop.f32.mrb[0].mxu0
        %v410 = vadd.f32 %v245, %v409
        %v411 = vpop.f32.mrb[0].mxu0
        %412 = vmatprep.mubr.f32.mxu0 0.0
        %413 = vmatmul.mubr.f32.gmra.mrb[0].mxu0 %v293
        %v414 = vpop.f32.mrb[0].mxu0
        %v415 = vadd.f32 %v245, %v414
        %v416 = vpop.f32.mrb[0].mxu0
        %417 = vmatprep.mubr.f32.mxu0 0.0
        %418 = vmatmul.mubr.f32.gmra.mrb[0].mxu0 %v296
        %v419 = vpop.f32.mrb[0].mxu0
        %v420 = vadd.f32 %v245, %v419
        %v421 = vpop.f32.mrb[0].mxu0
        %422 = vmatprep.mubr.f32.mxu0 0.0
        %423 = vmatmul.mubr.f32.gmra.mrb[0].mxu0 %v299
        %v424 = vpop.f32.mrb[0].mxu0
        %v425 = vadd.f32 %v245, %v424
        %v426 = vpop.f32.mrb[0].mxu0
        %427 = vmatprep.mubr.f32.mxu0 0.0
        %428 = vmatmul.mubr.f32.gmra.mrb[0].mxu0 %v302
        %v429 = vpop.f32.mrb[0].mxu0
        %v430 = vadd.f32 %v245, %v429
        %v431 = vpop.f32.mrb[0].mxu0
        %432 = vmatprep.mubr.f32.mxu0 0.0
        %433 = vmatmul.mubr.f32.gmra.mrb[0].mxu0 %v305
        %v434 = vpop.f32.mrb[0].mxu0
        %v435 = vadd.f32 %v245, %v434
        %v436 = vpop.f32.mrb[0].mxu0
        %437 = vmatprep.mubr.f32.mxu0 0.0
        %438 = vmatmul.mubr.f32.gmra.mrb[0].mxu0 %v308
        %v439 = vpop.f32.mrb[0].mxu0
        %v440 = vadd.f32 %v245, %v439
        %v441 = vpop.f32.mrb[0].mxu0
        %442 = vmatprep.mubr.f32.mxu0 0.0
        %443 = vmatmul.mubr.f32.gmra.mrb[0].mxu0 %v311
        %v444 = vpop.f32.mrb[0].mxu0
        %v445 = vadd.f32 %v245, %v444
        %v446 = vpop.f32.mrb[0].mxu0
        %447 = vmatprep.mubr.f32.mxu0 0.0
        %448 = vmatmul.mubr.f32.gmra.mrb[0].mxu0 %v314
        %v449 = vpop.f32.mrb[0].mxu0
        %v450 = vadd.f32 %v245, %v449
        %v451 = vpop.f32.mrb[0].mxu0
        %452 = vmatprep.mubr.f32.mxu0 0.0
        %453 = vmatmul.mubr.f32.gmra.mrb[0].mxu0 %v317
        %v454 = vpop.f32.mrb[0].mxu0
        %v455 = vadd.f32 %v245, %v454
        %v456 = vpop.f32.mrb[0].mxu0
        %457 = vmatprep.mubr.f32.mxu0 0.0
        %458 = vmatmul.mubr.f32.gmra.mrb[0].mxu0 %v320
        %v459 = vpop.f32.mrb[0].mxu0
        %v460 = vadd.f32 %v245, %v459
        %v461 = vpop.f32.mrb[0].mxu0
        %462 = vmatprep.mubr.f32.mxu0 0.0
        %463 = vmatmul.mubr.f32.gmra.mrb[0].mxu0 %v323
        %v464 = vpop.f32.mrb[0].mxu0
        %v465 = vadd.f32 %v245, %v464
        %v466 = vpop.f32.mrb[0].mxu0
        %467 = vmatprep.mubr.f32.mxu0 0.0
        %468 = vmatmul.mubr.f32.gmra.mrb[0].mxu0 %v326
        %v469 = vpop.f32.mrb[0].mxu0
        %v470 = vadd.f32 %v245, %v469
        %v471 = vpop.f32.mrb[0].mxu0
        %472 = vdwg.mxu0
        %vm473 = vcmask 523264
        %474 = vst.msk [vmem:[%s230] sm:$0xff] %vm473, %v395
        %475 = vst.msk [vmem:[%s230 + $0x8] sm:$0xff] %vm473, %v400
        %476 = vst.msk [vmem:[%s230 + $0x10] sm:$0xff] %vm473, %v405
        %477 = vst.msk [vmem:[%s230 + $0x18] sm:$0xff] %vm473, %v410
        %478 = vst.msk [vmem:[%s230 + $0x20] sm:$0xff] %vm473, %v415
        %479 = vst.msk [vmem:[%s230 + $0x28] sm:$0xff] %vm473, %v420
        %480 = vst.msk [vmem:[%s230 + $0x30] sm:$0xff] %vm473, %v425
        %481 = vst.msk [vmem:[%s230 + $0x38] sm:$0xff] %vm473, %v430
        %482 = vst.msk [vmem:[%s230 + $0x40] sm:$0xff] %vm473, %v435
        %483 = vst.msk [vmem:[%s230 + $0x48] sm:$0xff] %vm473, %v440
        %484 = vst.msk [vmem:[%s230 + $0x50] sm:$0xff] %vm473, %v445
        %485 = vst.msk [vmem:[%s230 + $0x58] sm:$0xff] %vm473, %v450
        %486 = vst.msk [vmem:[%s230 + $0x60] sm:$0xff] %vm473, %v455
        %487 = vst.msk [vmem:[%s230 + $0x68] sm:$0xff] %vm473, %v460
        %488 = vst.msk [vmem:[%s230 + $0x70] sm:$0xff] %vm473, %v465
        %489 = vst.msk [vmem:[%s230 + $0x78] sm:$0xff] %vm473, %v470
        %s490 = smul.u32 16, %s23
        %p491 = scmp.lt.s32.totalorder %s22, 1
        %s492 = scalar_select %p491, %s22, 1
        %p493 = scmp.lt.s32.totalorder %s490, 31
        %s494 = scalar_select %p493, %s490, 31
        %s495 = smul.addr %s492, 32
        %s496 = sadd.s32 %s494, %s495
        %s497 = smul.addr %s496, 8
        %s498 = scalar_lea.vmem %s3, %s497
        // Predicated region
        $region41: #{_lambda_.1} parent=31 // pred_check
          %p499 = pneg %p120
        $region42: #{_lambda_.1} parent=31 // pred_check_branch
          %501 = sbr.rel (%p499) target = $region44
        $region43: #{_lambda_.1} parent=31 // pred_region
          %s502 = smul.u32 16, %s23
        $region44: #{_lambda_.1} parent=31 // pred_fallthru
          _
      $region32: #{_lambda_.1} parent=5 // pred_fallthru
        _
      %p503 = scmp.le.s32.totalorder 2, %s13
      // Predicated region
      $region45: #{_lambda_.1} parent=5 // pred_check
        %p504 = pneg %p503
      $region46: #{_lambda_.1} parent=5 // pred_check_branch
        %506 = sbr.rel (%p504) target = $region48
      $region47: #{_lambda_.1} parent=5 // pred_region
        %s507 = ssub.s32 %s13, 2
        // Predicated region
        $region49: #{_lambda_.1} parent=47 // pred_check
          %p508 = pneg %p126
        $region50: #{_lambda_.1} parent=47 // pred_check_branch
          %510 = sbr.rel (%p508) target = $region52
        $region51: #{_lambda_.1} parent=47 // pred_region
          %s511 = smul.u32 16, %s25
          %p512 = scmp.lt.s32.totalorder %s24, 1
          %s513 = scalar_select %p512, %s24, 1
          %p514 = scmp.lt.s32.totalorder %s511, 31
          %s515 = scalar_select %p514, %s511, 31
          %s516 = smul.addr %s513, 32
          %s517 = sadd.s32 %s515, %s516
          %s518 = smul.addr %s517, 8
          %s519 = scalar_lea.vmem %s3, %s518
        $region52: #{_lambda_.1} parent=47 // pred_fallthru
          _
      $region48: #{_lambda_.1} parent=5 // pred_fallthru
        _
    $region6: #{_lambda_.1} parent=1 // loop_footer
      %s17 = sadd.s32 1, %s13
    $region7: #{_lambda_.1} parent=1 // loop_footer_branch
      %12 = sbr.rel target = $region3
    $region8: #{_lambda_.1} parent=1 // loop_exit
      _
    %520 = vsyncpa [#allocation3], 1
    %s521 = scalar_lea.sflag [#allocation3], 1
    %522 = vsyncpa %s521, 1
    %523 = vsyncpa [#allocation5], 1

</llo_original>
